<compile_context>
chip_gen: v7x
topology: tpu7x:2x2x1
jax: 0.10.0
libtpu: 0.0.40
codegen_flags: <defaults>
</compile_context>

<pallas_src>
import jax
import jax.numpy as jnp
from jax import lax
from jax.experimental import pallas as pl
from jax.experimental.pallas import tpu as pltpu


def _round_up(n, k):
    return ((n + k - 1) // k) * k


def _spectral_kernel(xr_ref, xi_ref, wr_ref, ws_ref, wd_ref, or_ref, oi_ref):
    """Per-mode complex contraction over Cin (Gauss 3-multiply form).

    xr/xi : (Cin, TR, 128)        real / imag of x_ft (batch dim squeezed)
    wr    : (Cin, TCO, TR, 128)   Re(w)
    ws    : (Cin, TCO, TR, 128)   Re(w) + Im(w)
    wd    : (Cin, TCO, TR, 128)   Im(w) - Re(w)
    or/oi : (TCO, TR, 128)        real / imag of the output block
    """
    cin = xr_ref.shape[0]
    acc_r = jnp.zeros(or_ref.shape, jnp.float32)
    acc_i = jnp.zeros(oi_ref.shape, jnp.float32)
    # Explicit accumulation over Cin: live state stays ~output-block sized.
    for i in range(cin):
        xr = xr_ref[i][None]            # (1, TR, 128)
        xi = xi_ref[i][None]
        s = xr + xi
        k1 = wr_ref[i] * s              # (TCO, TR, 128)
        acc_r = acc_r + (k1 - ws_ref[i] * xi)   # Re = k1 - (wr+wi)*xi
        acc_i = acc_i + (k1 + wd_ref[i] * xr)   # Im = k1 + (wi-wr)*xr
    or_ref[...] = acc_r
    oi_ref[...] = acc_i


def _pick_tiles(cin, cout, rows, budget_bytes=24 * 1024 * 1024):
    """Pick (row_tile, cout_tile) from an explicit VMEM budget.

    Conservative across v5e/v6e/v7x (v7x has only 64 MiB physical VMEM).
    """
    # Bound each Gauss weight slab block to ~4 MiB at the minimum row tile (8)
    # by tiling Cout when channels are wide.
    slab_bytes_per_cout = 3 * cin * 8 * 128 * 4
    cout_cap = max(1, (4 * 1024 * 1024) // slab_bytes_per_cout)
    if cout <= cout_cap:
        cout_tile = cout
    else:
        cout_tile = max(d for d in range(1, cout_cap + 1) if cout % d == 0)
    # Grow the row tile until the double-buffered working set fills the budget.
    per_row = 512 * (2 * (2 * cin + 3 * cin * cout_tile + 2 * cout_tile)
                     + 6 * cout_tile)
    row_tile = max(8, min(512, (budget_bytes // per_row) // 8 * 8))
    row_tile = min(row_tile, _round_up(max(rows, 1), 8))
    return row_tile, cout_tile


def spectral_mode_contract(xr, xi, wr, ws, wd, *, row_tile, cout_tile):
    """Complex per-mode contraction, modes on (sublane, lane).

    xr/xi : (Cin, B, R, 128) f32     w* : (Cin, Cout, R, 128) f32
    Returns (out_r, out_i), each (B, Cout, R, 128) f32.
    """
    cin, b, rows, lanes = xr.shape
    _, cout, _, _ = wr.shape
    assert lanes == 128
    assert rows % row_tile == 0 and cout % cout_tile == 0

    x_spec = pl.BlockSpec((cin, None, row_tile, 128),
                          lambda r, o, bb: (0, bb, r, 0))
    w_spec = pl.BlockSpec((cin, cout_tile, row_tile, 128),
                          lambda r, o, bb: (0, o, r, 0))
    o_spec = pl.BlockSpec((None, cout_tile, row_tile, 128),
                          lambda r, o, bb: (bb, o, r, 0))

    out_sds = jax.ShapeDtypeStruct((b, cout, rows, 128), jnp.float32)
    return pl.pallas_call(
        _spectral_kernel,
        out_shape=(out_sds, out_sds),
        grid_spec=pltpu.PrefetchScalarGridSpec(
            num_scalar_prefetch=0,
            grid=(rows // row_tile, cout // cout_tile, b),
            in_specs=[x_spec, x_spec, w_spec, w_spec, w_spec],
            out_specs=[o_spec, o_spec],
        ),
        compiler_params=pltpu.CompilerParams(
            dimension_semantics=("parallel", "parallel", "parallel"),
            vmem_limit_bytes=48 * 1024 * 1024,
        ),
    )(xr, xi, wr, ws, wd)


class SpectralConv3d:
    """JAX/Pallas port of the PyTorch SpectralConv3d module (forward pass)."""

    def __init__(self, in_c, out_c, m1, m2, m3, key):
        # torch: weights = 1/(in_c*out_c) * randn(in_c, out_c, m1, m2, m3, cfloat)
        kr, ki = jax.random.split(key)
        scale = 1.0 / (in_c * out_c)
        shape = (in_c, out_c, m1, m2, m3)
        self.w_real = scale * jax.random.normal(kr, shape, jnp.float32)
        self.w_imag = scale * jax.random.normal(ki, shape, jnp.float32)
        self.in_c, self.out_c = in_c, out_c
        self.m1, self.m2, self.m3 = m1, m2, m3

        # Hoisted, kernel-ready weight layout: modes flattened row-major onto
        # (rows, 128); rows padded up to a multiple of the chosen row tile.
        M = m1 * m2 * m3
        rows = pl.cdiv(M, 128)
        self._row_tile, self._cout_tile = _pick_tiles(in_c, out_c, rows)
        rows_p = _round_up(max(rows, 1), self._row_tile)
        Mp = rows_p * 128
        self._M, self._Mp, self._rows_p = M, Mp, rows_p

        def pack(w):
            w = w.reshape(in_c, out_c, M)
            w = jnp.pad(w, ((0, 0), (0, 0), (0, Mp - M)))
            return w.reshape(in_c, out_c, rows_p, 128)

        wr = pack(self.w_real)
        wi = pack(self.w_imag)
        # Gauss 3-multiply pre-combinations (one extra slab vs. wr/wi alone).
        self._wr = wr
        self._ws = wr + wi
        self._wd = wi - wr
        # TODO(synk): weight slabs could be stored bf16 to halve HBM traffic;
        # kept f32 to preserve the torch module's cfloat numerics.

    def __call__(self, x):
        B, C, D, H, W = x.shape
        assert C == self.in_c
        m1, m2, m3 = self.m1, self.m2, self.m3
        M, Mp, rows_p = self._M, self._Mp, self._rows_p

        # TODO(synk): FFTs have no Pallas primitive; rfftn/irfftn stay in XLA.
        x_ft = jnp.fft.rfftn(x, axes=(2, 3, 4))              # (B,C,D,H,W//2+1)
        x_low = x_ft[:, :, :m1, :m2, :m3].reshape(B, C, M)
        x_low = jnp.transpose(x_low, (1, 0, 2))              # (Cin, B, M)

        def pack_x(a):
            a = jnp.pad(a.astype(jnp.float32), ((0, 0), (0, 0), (0, Mp - M)))
            return a.reshape(self.in_c, B, rows_p, 128)

        xr = pack_x(jnp.real(x_low))
        xi = pack_x(jnp.imag(x_low))

        out_r, out_i = spectral_mode_contract(
            xr, xi, self._wr, self._ws, self._wd,
            row_tile=self._row_tile, cout_tile=self._cout_tile)

        def unpack(o):                                       # (B,Cout,rows_p,128)
            o = o.reshape(B, self.out_c, Mp)[:, :, :M]
            return o.reshape(B, self.out_c, m1, m2, m3)

        out_low = lax.complex(unpack(out_r), unpack(out_i))  # complex64
        # Zero-pad to the full rFFT spectrum — equivalent to torch's
        # zeros_like(x_ft) + slice assignment (torch's forward itself only
        # works when out_c == in_c).
        out_ft = jnp.pad(
            out_low,
            ((0, 0), (0, 0), (0, D - m1), (0, H - m2), (0, W // 2 + 1 - m3)))
        return jnp.fft.irfftn(out_ft, s=(D, H, W), axes=(2, 3, 4))


def _reference(x, w_real, w_imag, m1, m2, m3):
    """Pure-JAX reference matching the PyTorch forward exactly."""
    B, C, D, H, W = x.shape
    x_ft = jnp.fft.rfftn(x, axes=(2, 3, 4))
    w = (w_real + 1j * w_imag).astype(jnp.complex64)
    out_low = jnp.einsum('bixyz,ioxyz->boxyz', x_ft[:, :, :m1, :m2, :m3], w)
    out_ft = jnp.zeros_like(x_ft)
    out_ft = out_ft.at[:, :, :m1, :m2, :m3].set(out_low)
    return jnp.fft.irfftn(out_ft, s=(D, H, W), axes=(2, 3, 4))


if __name__ == "__main__":
    key = jax.random.PRNGKey(0)
    k_x, k_w = jax.random.split(key)

    B, C_in, C_out = 2, 4, 4
    D, H, W = 16, 16, 16
    m1, m2, m3 = 4, 4, 3

    x = jax.random.normal(k_x, (B, C_in, D, H, W), jnp.float32)

    module = SpectralConv3d(C_in, C_out, m1, m2, m3, k_w)
    out = jax.block_until_ready(module(x))

    ref = _reference(x, module.w_real, module.w_imag, m1, m2, m3)
    assert out.shape == (B, C_out, D, H, W)
    assert jnp.allclose(out, ref, atol=1e-4, rtol=1e-4), "mismatch vs reference"

    print("KERNEL_OK")
</pallas_src>

<mosaic_0001>
module attributes {stable_mosaic.version = 11 : i64} {
  func.func @_spectral_kernel(%arg0: i32, %arg1: i32, %arg2: i32, %arg3: memref<4x1x8x128xf32, #tpu.memory_space<vmem>>, %arg4: memref<4x1x8x128xf32, #tpu.memory_space<vmem>>, %arg5: memref<4x4x8x128xf32, #tpu.memory_space<vmem>>, %arg6: memref<4x4x8x128xf32, #tpu.memory_space<vmem>>, %arg7: memref<4x4x8x128xf32, #tpu.memory_space<vmem>>, %arg8: memref<1x4x8x128xf32, #tpu.memory_space<vmem>>, %arg9: memref<1x4x8x128xf32, #tpu.memory_space<vmem>>) attributes {dimension_semantics = [#tpu.dimension_semantics<parallel>, #tpu.dimension_semantics<parallel>, #tpu.dimension_semantics<parallel>], iteration_bounds = array<i64: 1, 1, 2>, scalar_prefetch = 0 : i64, scratch_operands = 0 : i64, tpu.core_type = #tpu.core_type<tc>, window_params = [{transform_indices = @transform_0, window_bounds = array<i64: 4, 1, 8, 128>}, {transform_indices = @transform_1, window_bounds = array<i64: 4, 1, 8, 128>}, {transform_indices = @transform_2, window_bounds = array<i64: 4, 4, 8, 128>}, {transform_indices = @transform_3, window_bounds = array<i64: 4, 4, 8, 128>}, {transform_indices = @transform_4, window_bounds = array<i64: 4, 4, 8, 128>}, {transform_indices = @transform_5, window_bounds = array<i64: 1, 4, 8, 128>}, {transform_indices = @transform_6, window_bounds = array<i64: 1, 4, 8, 128>}]} {
    %cst = arith.constant 0.000000e+00 : f32
    %0 = vector.broadcast %cst : f32 to vector<4x8x128xf32>
    %cst_0 = arith.constant 0.000000e+00 : f32
    %1 = vector.broadcast %cst_0 : f32 to vector<4x8x128xf32>
    %c0 = arith.constant 0 : index
    %c0_1 = arith.constant 0 : index
    %c0_2 = arith.constant 0 : index
    %c0_3 = arith.constant 0 : index
    %2 = vector.load %arg3[%c0, %c0_1, %c0_2, %c0_3] : memref<4x1x8x128xf32, #tpu.memory_space<vmem>>, vector<1x1x8x128xf32>
    %3 = vector.shape_cast %2 : vector<1x1x8x128xf32> to vector<8x128xf32>
    %4 = vector.shape_cast %3 : vector<8x128xf32> to vector<1x8x128xf32>
    %c0_4 = arith.constant 0 : index
    %c0_5 = arith.constant 0 : index
    %c0_6 = arith.constant 0 : index
    %c0_7 = arith.constant 0 : index
    %5 = vector.load %arg4[%c0_4, %c0_5, %c0_6, %c0_7] : memref<4x1x8x128xf32, #tpu.memory_space<vmem>>, vector<1x1x8x128xf32>
    %6 = vector.shape_cast %5 : vector<1x1x8x128xf32> to vector<8x128xf32>
    %7 = vector.shape_cast %6 : vector<8x128xf32> to vector<1x8x128xf32>
    %8 = arith.addf %4, %7 : vector<1x8x128xf32>
    %c0_8 = arith.constant 0 : index
    %c0_9 = arith.constant 0 : index
    %c0_10 = arith.constant 0 : index
    %c0_11 = arith.constant 0 : index
    %9 = vector.load %arg5[%c0_8, %c0_9, %c0_10, %c0_11] : memref<4x4x8x128xf32, #tpu.memory_space<vmem>>, vector<1x4x8x128xf32>
    %10 = vector.shape_cast %9 : vector<1x4x8x128xf32> to vector<4x8x128xf32>
    %11 = vector.broadcast %8 : vector<1x8x128xf32> to vector<4x8x128xf32>
    %12 = arith.mulf %10, %11 : vector<4x8x128xf32>
    %c0_12 = arith.constant 0 : index
    %c0_13 = arith.constant 0 : index
    %c0_14 = arith.constant 0 : index
    %c0_15 = arith.constant 0 : index
    %13 = vector.load %arg6[%c0_12, %c0_13, %c0_14, %c0_15] : memref<4x4x8x128xf32, #tpu.memory_space<vmem>>, vector<1x4x8x128xf32>
    %14 = vector.shape_cast %13 : vector<1x4x8x128xf32> to vector<4x8x128xf32>
    %15 = vector.broadcast %7 : vector<1x8x128xf32> to vector<4x8x128xf32>
    %16 = arith.mulf %14, %15 : vector<4x8x128xf32>
    %17 = arith.subf %12, %16 : vector<4x8x128xf32>
    %18 = arith.addf %0, %17 : vector<4x8x128xf32>
    %c0_16 = arith.constant 0 : index
    %c0_17 = arith.constant 0 : index
    %c0_18 = arith.constant 0 : index
    %c0_19 = arith.constant 0 : index
    %19 = vector.load %arg7[%c0_16, %c0_17, %c0_18, %c0_19] : memref<4x4x8x128xf32, #tpu.memory_space<vmem>>, vector<1x4x8x128xf32>
    %20 = vector.shape_cast %19 : vector<1x4x8x128xf32> to vector<4x8x128xf32>
    %21 = vector.broadcast %4 : vector<1x8x128xf32> to vector<4x8x128xf32>
    %22 = arith.mulf %20, %21 : vector<4x8x128xf32>
    %23 = arith.addf %12, %22 : vector<4x8x128xf32>
    %24 = arith.addf %1, %23 : vector<4x8x128xf32>
    %c1 = arith.constant 1 : index
    %c0_20 = arith.constant 0 : index
    %c0_21 = arith.constant 0 : index
    %c0_22 = arith.constant 0 : index
    %25 = vector.load %arg3[%c1, %c0_20, %c0_21, %c0_22] : memref<4x1x8x128xf32, #tpu.memory_space<vmem>>, vector<1x1x8x128xf32>
    %26 = vector.shape_cast %25 : vector<1x1x8x128xf32> to vector<8x128xf32>
    %27 = vector.shape_cast %26 : vector<8x128xf32> to vector<1x8x128xf32>
    %c1_23 = arith.constant 1 : index
    %c0_24 = arith.constant 0 : index
    %c0_25 = arith.constant 0 : index
    %c0_26 = arith.constant 0 : index
    %28 = vector.load %arg4[%c1_23, %c0_24, %c0_25, %c0_26] : memref<4x1x8x128xf32, #tpu.memory_space<vmem>>, vector<1x1x8x128xf32>
    %29 = vector.shape_cast %28 : vector<1x1x8x128xf32> to vector<8x128xf32>
    %30 = vector.shape_cast %29 : vector<8x128xf32> to vector<1x8x128xf32>
    %31 = arith.addf %27, %30 : vector<1x8x128xf32>
    %c1_27 = arith.constant 1 : index
    %c0_28 = arith.constant 0 : index
    %c0_29 = arith.constant 0 : index
    %c0_30 = arith.constant 0 : index
    %32 = vector.load %arg5[%c1_27, %c0_28, %c0_29, %c0_30] : memref<4x4x8x128xf32, #tpu.memory_space<vmem>>, vector<1x4x8x128xf32>
    %33 = vector.shape_cast %32 : vector<1x4x8x128xf32> to vector<4x8x128xf32>
    %34 = vector.broadcast %31 : vector<1x8x128xf32> to vector<4x8x128xf32>
    %35 = arith.mulf %33, %34 : vector<4x8x128xf32>
    %c1_31 = arith.constant 1 : index
    %c0_32 = arith.constant 0 : index
    %c0_33 = arith.constant 0 : index
    %c0_34 = arith.constant 0 : index
    %36 = vector.load %arg6[%c1_31, %c0_32, %c0_33, %c0_34] : memref<4x4x8x128xf32, #tpu.memory_space<vmem>>, vector<1x4x8x128xf32>
    %37 = vector.shape_cast %36 : vector<1x4x8x128xf32> to vector<4x8x128xf32>
    %38 = vector.broadcast %30 : vector<1x8x128xf32> to vector<4x8x128xf32>
    %39 = arith.mulf %37, %38 : vector<4x8x128xf32>
    %40 = arith.subf %35, %39 : vector<4x8x128xf32>
    %41 = arith.addf %18, %40 : vector<4x8x128xf32>
    %c1_35 = arith.constant 1 : index
    %c0_36 = arith.constant 0 : index
    %c0_37 = arith.constant 0 : index
    %c0_38 = arith.constant 0 : index
    %42 = vector.load %arg7[%c1_35, %c0_36, %c0_37, %c0_38] : memref<4x4x8x128xf32, #tpu.memory_space<vmem>>, vector<1x4x8x128xf32>
    %43 = vector.shape_cast %42 : vector<1x4x8x128xf32> to vector<4x8x128xf32>
    %44 = vector.broadcast %27 : vector<1x8x128xf32> to vector<4x8x128xf32>
    %45 = arith.mulf %43, %44 : vector<4x8x128xf32>
    %46 = arith.addf %35, %45 : vector<4x8x128xf32>
    %47 = arith.addf %24, %46 : vector<4x8x128xf32>
    %c2 = arith.constant 2 : index
    %c0_39 = arith.constant 0 : index
    %c0_40 = arith.constant 0 : index
    %c0_41 = arith.constant 0 : index
    %48 = vector.load %arg3[%c2, %c0_39, %c0_40, %c0_41] : memref<4x1x8x128xf32, #tpu.memory_space<vmem>>, vector<1x1x8x128xf32>
    %49 = vector.shape_cast %48 : vector<1x1x8x128xf32> to vector<8x128xf32>
    %50 = vector.shape_cast %49 : vector<8x128xf32> to vector<1x8x128xf32>
    %c2_42 = arith.constant 2 : index
    %c0_43 = arith.constant 0 : index
    %c0_44 = arith.constant 0 : index
    %c0_45 = arith.constant 0 : index
    %51 = vector.load %arg4[%c2_42, %c0_43, %c0_44, %c0_45] : memref<4x1x8x128xf32, #tpu.memory_space<vmem>>, vector<1x1x8x128xf32>
    %52 = vector.shape_cast %51 : vector<1x1x8x128xf32> to vector<8x128xf32>
    %53 = vector.shape_cast %52 : vector<8x128xf32> to vector<1x8x128xf32>
    %54 = arith.addf %50, %53 : vector<1x8x128xf32>
    %c2_46 = arith.constant 2 : index
    %c0_47 = arith.constant 0 : index
    %c0_48 = arith.constant 0 : index
    %c0_49 = arith.constant 0 : index
    %55 = vector.load %arg5[%c2_46, %c0_47, %c0_48, %c0_49] : memref<4x4x8x128xf32, #tpu.memory_space<vmem>>, vector<1x4x8x128xf32>
    %56 = vector.shape_cast %55 : vector<1x4x8x128xf32> to vector<4x8x128xf32>
    %57 = vector.broadcast %54 : vector<1x8x128xf32> to vector<4x8x128xf32>
    %58 = arith.mulf %56, %57 : vector<4x8x128xf32>
    %c2_50 = arith.constant 2 : index
    %c0_51 = arith.constant 0 : index
    %c0_52 = arith.constant 0 : index
    %c0_53 = arith.constant 0 : index
    %59 = vector.load %arg6[%c2_50, %c0_51, %c0_52, %c0_53] : memref<4x4x8x128xf32, #tpu.memory_space<vmem>>, vector<1x4x8x128xf32>
    %60 = vector.shape_cast %59 : vector<1x4x8x128xf32> to vector<4x8x128xf32>
    %61 = vector.broadcast %53 : vector<1x8x128xf32> to vector<4x8x128xf32>
    %62 = arith.mulf %60, %61 : vector<4x8x128xf32>
    %63 = arith.subf %58, %62 : vector<4x8x128xf32>
    %64 = arith.addf %41, %63 : vector<4x8x128xf32>
    %c2_54 = arith.constant 2 : index
    %c0_55 = arith.constant 0 : index
    %c0_56 = arith.constant 0 : index
    %c0_57 = arith.constant 0 : index
    %65 = vector.load %arg7[%c2_54, %c0_55, %c0_56, %c0_57] : memref<4x4x8x128xf32, #tpu.memory_space<vmem>>, vector<1x4x8x128xf32>
    %66 = vector.shape_cast %65 : vector<1x4x8x128xf32> to vector<4x8x128xf32>
    %67 = vector.broadcast %50 : vector<1x8x128xf32> to vector<4x8x128xf32>
    %68 = arith.mulf %66, %67 : vector<4x8x128xf32>
    %69 = arith.addf %58, %68 : vector<4x8x128xf32>
    %70 = arith.addf %47, %69 : vector<4x8x128xf32>
    %c3 = arith.constant 3 : index
    %c0_58 = arith.constant 0 : index
    %c0_59 = arith.constant 0 : index
    %c0_60 = arith.constant 0 : index
    %71 = vector.load %arg3[%c3, %c0_58, %c0_59, %c0_60] : memref<4x1x8x128xf32, #tpu.memory_space<vmem>>, vector<1x1x8x128xf32>
    %72 = vector.shape_cast %71 : vector<1x1x8x128xf32> to vector<8x128xf32>
    %73 = vector.shape_cast %72 : vector<8x128xf32> to vector<1x8x128xf32>
    %c3_61 = arith.constant 3 : index
    %c0_62 = arith.constant 0 : index
    %c0_63 = arith.constant 0 : index
    %c0_64 = arith.constant 0 : index
    %74 = vector.load %arg4[%c3_61, %c0_62, %c0_63, %c0_64] : memref<4x1x8x128xf32, #tpu.memory_space<vmem>>, vector<1x1x8x128xf32>
    %75 = vector.shape_cast %74 : vector<1x1x8x128xf32> to vector<8x128xf32>
    %76 = vector.shape_cast %75 : vector<8x128xf32> to vector<1x8x128xf32>
    %77 = arith.addf %73, %76 : vector<1x8x128xf32>
    %c3_65 = arith.constant 3 : index
    %c0_66 = arith.constant 0 : index
    %c0_67 = arith.constant 0 : index
    %c0_68 = arith.constant 0 : index
    %78 = vector.load %arg5[%c3_65, %c0_66, %c0_67, %c0_68] : memref<4x4x8x128xf32, #tpu.memory_space<vmem>>, vector<1x4x8x128xf32>
    %79 = vector.shape_cast %78 : vector<1x4x8x128xf32> to vector<4x8x128xf32>
    %80 = vector.broadcast %77 : vector<1x8x128xf32> to vector<4x8x128xf32>
    %81 = arith.mulf %79, %80 : vector<4x8x128xf32>
    %c3_69 = arith.constant 3 : index
    %c0_70 = arith.constant 0 : index
    %c0_71 = arith.constant 0 : index
    %c0_72 = arith.constant 0 : index
    %82 = vector.load %arg6[%c3_69, %c0_70, %c0_71, %c0_72] : memref<4x4x8x128xf32, #tpu.memory_space<vmem>>, vector<1x4x8x128xf32>
    %83 = vector.shape_cast %82 : vector<1x4x8x128xf32> to vector<4x8x128xf32>
    %84 = vector.broadcast %76 : vector<1x8x128xf32> to vector<4x8x128xf32>
    %85 = arith.mulf %83, %84 : vector<4x8x128xf32>
    %86 = arith.subf %81, %85 : vector<4x8x128xf32>
    %87 = arith.addf %64, %86 : vector<4x8x128xf32>
    %c3_73 = arith.constant 3 : index
    %c0_74 = arith.constant 0 : index
    %c0_75 = arith.constant 0 : index
    %c0_76 = arith.constant 0 : index
    %88 = vector.load %arg7[%c3_73, %c0_74, %c0_75, %c0_76] : memref<4x4x8x128xf32, #tpu.memory_space<vmem>>, vector<1x4x8x128xf32>
    %89 = vector.shape_cast %88 : vector<1x4x8x128xf32> to vector<4x8x128xf32>
    %90 = vector.broadcast %73 : vector<1x8x128xf32> to vector<4x8x128xf32>
    %91 = arith.mulf %89, %90 : vector<4x8x128xf32>
    %92 = arith.addf %81, %91 : vector<4x8x128xf32>
    %93 = arith.addf %70, %92 : vector<4x8x128xf32>
    %c0_77 = arith.constant 0 : index
    %c0_78 = arith.constant 0 : index
    %c0_79 = arith.constant 0 : index
    %c0_80 = arith.constant 0 : index
    %94 = vector.load %arg8[%c0_77, %c0_78, %c0_79, %c0_80] : memref<1x4x8x128xf32, #tpu.memory_space<vmem>>, vector<1x4x8x128xf32>
    %95 = vector.shape_cast %94 : vector<1x4x8x128xf32> to vector<4x8x128xf32>
    %96 = vector.shape_cast %87 : vector<4x8x128xf32> to vector<1x4x8x128xf32>
    tpu.vector_store %arg8[%c0_77, %c0_78, %c0_79, %c0_80], %96 {strides = array<i32>} : memref<1x4x8x128xf32, #tpu.memory_space<vmem>>, vector<1x4x8x128xf32>,
    %c0_81 = arith.constant 0 : index
    %c0_82 = arith.constant 0 : index
    %c0_83 = arith.constant 0 : index
    %c0_84 = arith.constant 0 : index
    %97 = vector.load %arg9[%c0_81, %c0_82, %c0_83, %c0_84] : memref<1x4x8x128xf32, #tpu.memory_space<vmem>>, vector<1x4x8x128xf32>
    %98 = vector.shape_cast %97 : vector<1x4x8x128xf32> to vector<4x8x128xf32>
    %99 = vector.shape_cast %93 : vector<4x8x128xf32> to vector<1x4x8x128xf32>
    tpu.vector_store %arg9[%c0_81, %c0_82, %c0_83, %c0_84], %99 {strides = array<i32>} : memref<1x4x8x128xf32, #tpu.memory_space<vmem>>, vector<1x4x8x128xf32>,
    return
  }
  func.func @transform_0(%arg0: i32, %arg1: i32, %arg2: i32) -> (i32, i32, i32, i32) {
    %c0_i32 = arith.constant 0 : i32
    %c0_i32_0 = arith.constant 0 : i32
    %c0_i32_1 = arith.constant 0 : i32
    return %c0_i32, %arg2, %arg0, %c0_i32_0 : i32, i32, i32, i32
  }
  func.func @transform_1(%arg0: i32, %arg1: i32, %arg2: i32) -> (i32, i32, i32, i32) {
    %c0_i32 = arith.constant 0 : i32
    %c0_i32_0 = arith.constant 0 : i32
    %c0_i32_1 = arith.constant 0 : i32
    return %c0_i32, %arg2, %arg0, %c0_i32_0 : i32, i32, i32, i32
  }
  func.func @transform_2(%arg0: i32, %arg1: i32, %arg2: i32) -> (i32, i32, i32, i32) {
    %c0_i32 = arith.constant 0 : i32
    %c0_i32_0 = arith.constant 0 : i32
    %c0_i32_1 = arith.constant 0 : i32
    return %c0_i32, %arg1, %arg0, %c0_i32_0 : i32, i32, i32, i32
  }
  func.func @transform_3(%arg0: i32, %arg1: i32, %arg2: i32) -> (i32, i32, i32, i32) {
    %c0_i32 = arith.constant 0 : i32
    %c0_i32_0 = arith.constant 0 : i32
    %c0_i32_1 = arith.constant 0 : i32
    return %c0_i32, %arg1, %arg0, %c0_i32_0 : i32, i32, i32, i32
  }
  func.func @transform_4(%arg0: i32, %arg1: i32, %arg2: i32) -> (i32, i32, i32, i32) {
    %c0_i32 = arith.constant 0 : i32
    %c0_i32_0 = arith.constant 0 : i32
    %c0_i32_1 = arith.constant 0 : i32
    return %c0_i32, %arg1, %arg0, %c0_i32_0 : i32, i32, i32, i32
  }
  func.func @transform_5(%arg0: i32, %arg1: i32, %arg2: i32) -> (i32, i32, i32, i32) {
    %c0_i32 = arith.constant 0 : i32
    %c0_i32_0 = arith.constant 0 : i32
    return %arg2, %arg1, %arg0, %c0_i32 : i32, i32, i32, i32
  }
  func.func @transform_6(%arg0: i32, %arg1: i32, %arg2: i32) -> (i32, i32, i32, i32) {
    %c0_i32 = arith.constant 0 : i32
    %c0_i32_0 = arith.constant 0 : i32
    return %arg2, %arg1, %arg0, %c0_i32 : i32, i32, i32, i32
  }
}

</mosaic_0001>

<llo_original>
// kernel: tpu_custom_call.1
$region0: #{tpu_custom_call.1}
  #allocation0 [shape = 'u32[]', space=smem, size = 0x4, offset = 0x4, fixed_abs, tag = 'smem constant byte address 0x4 - core index']
  #allocation1 [shape = 'u32[144,128]{1,0:T(1,128)}', space=vmem, size = 0x12000, scoped, tag = 'internal scratch']
  %s0 = inlined_call_operand.hbm [shape: f32[4,2,8,128], index: 0, kind: input, shape index: {}]
  %s1 = inlined_call_operand.hbm [shape: f32[4,2,8,128], index: 1, kind: input, shape index: {}]
  %s2 = inlined_call_operand.hbm [shape: f32[4,4,8,128], index: 2, kind: input, shape index: {}]
  %s3 = inlined_call_operand.hbm [shape: f32[4,4,8,128], index: 3, kind: input, shape index: {}]
  %s4 = inlined_call_operand.hbm [shape: f32[4,4,8,128], index: 4, kind: input, shape index: {}]
  %s5 = inlined_call_operand.hbm [shape: f32[2,4,8,128], index: 5, kind: output, shape index: {0}]
  %s6 = inlined_call_operand.hbm [shape: f32[2,4,8,128], index: 6, kind: output, shape index: {1}]
  %7 = xla_tuple %s5, %s6
  %s8 = sld [smem:[#allocation0]]
  $region81: #{tpu_custom_call.1} parent=0
    _
  %s10 = ssub.s32 1, %s8
  %s11 = scalar_select 0, %s10, %s8
  $region1: #{tpu_custom_call.1} parent=0
    #allocation2 [shape = 'u8[32768]{0}', space=vmem, size = 0x8000, scoped, tag = 'input window, operand 0']
    #allocation3 [shape = 's32[2]{0}', space=sflag, size = 0x8, scoped, tag = 'scoped memory for tpu_custom_call.1']
    #allocation4 [shape = 's32[2]{0}', space=sflag, size = 0x8, scoped, tag = 'scoped memory for tpu_custom_call.1']
    #allocation5 [shape = 'u8[32768]{0}', space=vmem, size = 0x8000, scoped, tag = 'input window, operand 1']
    #allocation6 [shape = 's32[2]{0}', space=sflag, size = 0x8, scoped, tag = 'scoped memory for tpu_custom_call.1']
    #allocation7 [shape = 'u8[65536]{0}', space=vmem, size = 0x10000, scoped, tag = 'input window, operand 2, single buffered']
    #allocation8 [shape = 'u8[65536]{0}', space=vmem, size = 0x10000, scoped, tag = 'input window, operand 3, single buffered']
    #allocation9 [shape = 's32[1]{0}', space=sflag, size = 0x4, scoped, tag = 'scoped memory for tpu_custom_call.1']
    #allocation10 [shape = 'u8[65536]{0}', space=vmem, size = 0x10000, scoped, tag = 'input window, operand 4, single buffered']
    #allocation11 [shape = 'u8[32768]{0}', space=vmem, size = 0x8000, scoped, tag = 'output window, operand 0']
    #allocation12 [shape = 'u8[32768]{0}', space=vmem, size = 0x8000, scoped, tag = 'output window, operand 1']
    #allocation13 [shape = 's32[2]{0}', space=sflag, size = 0x8, scoped, tag = 'scoped memory for tpu_custom_call.1']
    %12 = vsyncpa [#allocation3], 0
    %s13 = scalar_lea.sflag [#allocation3], 1
    %14 = vsyncpa %s13, 0
    %15 = vsyncpa [#allocation6], 0
    %s16 = scalar_lea.sflag [#allocation6], 1
    %17 = vsyncpa %s16, 0
    %18 = vsyncpa [#allocation9], 0
    %19 = vsyncpa [#allocation4], 0
    %s20 = scalar_lea.sflag [#allocation4], 1
    %21 = vsyncpa %s20, 0
    %22 = vsyncpa [#allocation13], 0
    %s23 = scalar_lea.sflag [#allocation13], 1
    %24 = vsyncpa %s23, 0
    loop: start=0, step=1, limit=4
    $region2: #{tpu_custom_call.1} parent=1 // loop_pre_header
      _
    $region3: #{tpu_custom_call.1} parent=1 // loop_header
      %s26 = sphi 0, %s30
      %p27 = scmp.ge.s32.totalorder %s26, 4
      %s33 = sphi 0, %s52
      %s34 = sphi 0, %s48
      %s35 = sphi 0, %s44
      %s36 = sphi 0, %s33
      %s37 = sphi 0, %s34
      %s38 = sphi 0, %s35
      %s39 = sphi 0, %s36
      %s40 = sphi 0, %s37
      %s41 = sphi 0, %s38
      %s57 = sphi 0, %s59
      %s60 = sphi 0, %s57
      %s61 = sphi 0, %s60
      %s77 = sphi 0, %s61
      %s85 = sphi 0, %s87
      %s88 = sphi 0, %s85
      %s89 = sphi 0, %s88
      %s105 = sphi 0, %s89
      %s113 = sphi 0, %s115
      %s116 = sphi 0, %s113
      %s117 = sphi 0, %s116
      %s133 = sphi 0, %s117
      %s141 = sphi 0, %s143
      %s144 = sphi 0, %s141
      %s145 = sphi 0, %s144
      %s161 = sphi 0, %s145
      %s169 = sphi 0, %s171
      %s172 = sphi 0, %s169
      %s173 = sphi 0, %s172
      %s189 = sphi 0, %s173
      %s199 = sphi 0, %s201
      %s202 = sphi 0, %s199
      %s203 = sphi 0, %s202
      %s219 = sphi 0, %s203
      %s229 = sphi 0, %s231
      %s232 = sphi 0, %s229
      %s233 = sphi 0, %s232
      %s249 = sphi 0, %s233
    $region4: #{tpu_custom_call.1} parent=1 // loop_header_branch
      %29 = sbr.rel (%p27) target = $region8
    $region5: #{tpu_custom_call.1} parent=1 // loop_body
      %s31 = ssub.s32 %s26, 1
      %s32 = ssub.s32 %s26, 2
      %s42 = sadd.s32 1, %s35
      %p43 = scmp.ge.s32.totalorder %s42, 2
      %s44 = scalar_select %p43, 0, %s42
      %s45 = sadd.s32 1, %s34
      %s46 = scalar_select %p43, %s45, %s34
      %p47 = scmp.ge.s32.totalorder %s46, 1
      %s48 = scalar_select %p47, 0, %s46
      %s49 = sadd.s32 1, %s33
      %s50 = scalar_select %p47, %s49, %s33
      %p51 = scmp.ge.s32.totalorder %s50, 1
      %s52 = scalar_select %p51, 0, %s50
      %s53 = ssub.s32 %s35, %s44
      %s54 = ssub.s32 %s33, %s52
      %s55 = sor.u32 %s53, %s54
      %p56 = scmp.eq.s32.totalorder %s55, 0
      %s58 = sadd.s32 %s57, 1
      %s59 = scalar_select %p56, %s57, %s58
      %p62 = pneg %p56
      %p63 = scmp.eq.s32.totalorder %s26, 1
      %p64 = por %p62, %p63
      %p65 = scmp.ne.s32.totalorder %s57, %s60
      %p66 = scmp.eq.s32.totalorder %s26, 0
      %p67 = por %p65, %p66
      %p68 = scmp.ne.s32.totalorder %s57, %s60
      %p69 = scmp.eq.s32.totalorder %s31, 1
      %p70 = por %p68, %p69
      %p71 = scmp.ne.s32.totalorder %s60, %s61
      %p72 = scmp.eq.s32.totalorder %s31, 0
      %p73 = por %p71, %p72
      %p74 = scmp.ne.s32.totalorder %s60, %s61
      %p75 = scmp.eq.s32.totalorder %s32, 1
      %p76 = por %p74, %p75
      %p78 = scmp.ne.s32.totalorder %s61, %s77
      %p79 = scmp.eq.s32.totalorder %s32, 0
      %p80 = por %p78, %p79
      %s81 = ssub.s32 %s35, %s44
      %s82 = ssub.s32 %s33, %s52
      %s83 = sor.u32 %s81, %s82
      %p84 = scmp.eq.s32.totalorder %s83, 0
      %s86 = sadd.s32 %s85, 1
      %s87 = scalar_select %p84, %s85, %s86
      %p90 = pneg %p84
      %p91 = scmp.eq.s32.totalorder %s26, 1
      %p92 = por %p90, %p91
      %p93 = scmp.ne.s32.totalorder %s85, %s88
      %p94 = scmp.eq.s32.totalorder %s26, 0
      %p95 = por %p93, %p94
      %p96 = scmp.ne.s32.totalorder %s85, %s88
      %p97 = scmp.eq.s32.totalorder %s31, 1
      %p98 = por %p96, %p97
      %p99 = scmp.ne.s32.totalorder %s88, %s89
      %p100 = scmp.eq.s32.totalorder %s31, 0
      %p101 = por %p99, %p100
      %p102 = scmp.ne.s32.totalorder %s88, %s89
      %p103 = scmp.eq.s32.totalorder %s32, 1
      %p104 = por %p102, %p103
      %p106 = scmp.ne.s32.totalorder %s89, %s105
      %p107 = scmp.eq.s32.totalorder %s32, 0
      %p108 = por %p106, %p107
      %s109 = ssub.s32 %s34, %s48
      %s110 = ssub.s32 %s33, %s52
      %s111 = sor.u32 %s109, %s110
      %p112 = scmp.eq.s32.totalorder %s111, 0
      %s114 = sadd.s32 %s113, 1
      %s115 = scalar_select %p112, %s113, %s114
      %p118 = pneg %p112
      %p119 = scmp.eq.s32.totalorder %s26, 1
      %p120 = por %p118, %p119
      %p121 = scmp.ne.s32.totalorder %s113, %s116
      %p122 = scmp.eq.s32.totalorder %s26, 0
      %p123 = por %p121, %p122
      %p124 = scmp.ne.s32.totalorder %s113, %s116
      %p125 = scmp.eq.s32.totalorder %s31, 1
      %p126 = por %p124, %p125
      %p127 = scmp.ne.s32.totalorder %s116, %s117
      %p128 = scmp.eq.s32.totalorder %s31, 0
      %p129 = por %p127, %p128
      %p130 = scmp.ne.s32.totalorder %s116, %s117
      %p131 = scmp.eq.s32.totalorder %s32, 1
      %p132 = por %p130, %p131
      %p134 = scmp.ne.s32.totalorder %s117, %s133
      %p135 = scmp.eq.s32.totalorder %s32, 0
      %p136 = por %p134, %p135
      %s137 = ssub.s32 %s34, %s48
      %s138 = ssub.s32 %s33, %s52
      %s139 = sor.u32 %s137, %s138
      %p140 = scmp.eq.s32.totalorder %s139, 0
      %s142 = sadd.s32 %s141, 1
      %s143 = scalar_select %p140, %s141, %s142
      %p146 = pneg %p140
      %p147 = scmp.eq.s32.totalorder %s26, 1
      %p148 = por %p146, %p147
      %p149 = scmp.ne.s32.totalorder %s141, %s144
      %p150 = scmp.eq.s32.totalorder %s26, 0
      %p151 = por %p149, %p150
      %p152 = scmp.ne.s32.totalorder %s141, %s144
      %p153 = scmp.eq.s32.totalorder %s31, 1
      %p154 = por %p152, %p153
      %p155 = scmp.ne.s32.totalorder %s144, %s145
      %p156 = scmp.eq.s32.totalorder %s31, 0
      %p157 = por %p155, %p156
      %p158 = scmp.ne.s32.totalorder %s144, %s145
      %p159 = scmp.eq.s32.totalorder %s32, 1
      %p160 = por %p158, %p159
      %p162 = scmp.ne.s32.totalorder %s145, %s161
      %p163 = scmp.eq.s32.totalorder %s32, 0
      %p164 = por %p162, %p163
      %s165 = ssub.s32 %s34, %s48
      %s166 = ssub.s32 %s33, %s52
      %s167 = sor.u32 %s165, %s166
      %p168 = scmp.eq.s32.totalorder %s167, 0
      %s170 = sadd.s32 %s169, 1
      %s171 = scalar_select %p168, %s169, %s170
      %p174 = pneg %p168
      %p175 = scmp.eq.s32.totalorder %s26, 1
      %p176 = por %p174, %p175
      %p177 = scmp.ne.s32.totalorder %s169, %s172
      %p178 = scmp.eq.s32.totalorder %s26, 0
      %p179 = por %p177, %p178
      %p180 = scmp.ne.s32.totalorder %s169, %s172
      %p181 = scmp.eq.s32.totalorder %s31, 1
      %p182 = por %p180, %p181
      %p183 = scmp.ne.s32.totalorder %s172, %s173
      %p184 = scmp.eq.s32.totalorder %s31, 0
      %p185 = por %p183, %p184
      %p186 = scmp.ne.s32.totalorder %s172, %s173
      %p187 = scmp.eq.s32.totalorder %s32, 1
      %p188 = por %p186, %p187
      %p190 = scmp.ne.s32.totalorder %s173, %s189
      %p191 = scmp.eq.s32.totalorder %s32, 0
      %p192 = por %p190, %p191
      %s193 = ssub.s32 %s35, %s44
      %s194 = ssub.s32 %s34, %s48
      %s195 = sor.u32 %s193, %s194
      %s196 = ssub.s32 %s33, %s52
      %s197 = sor.u32 %s195, %s196
      %p198 = scmp.eq.s32.totalorder %s197, 0
      %s200 = sadd.s32 %s199, 1
      %s201 = scalar_select %p198, %s199, %s200
      %p204 = pneg %p198
      %p205 = scmp.eq.s32.totalorder %s26, 1
      %p206 = por %p204, %p205
      %p207 = scmp.ne.s32.totalorder %s199, %s202
      %p208 = scmp.eq.s32.totalorder %s26, 0
      %p209 = por %p207, %p208
      %p210 = scmp.ne.s32.totalorder %s199, %s202
      %p211 = scmp.eq.s32.totalorder %s31, 1
      %p212 = por %p210, %p211
      %p213 = scmp.ne.s32.totalorder %s202, %s203
      %p214 = scmp.eq.s32.totalorder %s31, 0
      %p215 = por %p213, %p214
      %p216 = scmp.ne.s32.totalorder %s202, %s203
      %p217 = scmp.eq.s32.totalorder %s32, 1
      %p218 = por %p216, %p217
      %p220 = scmp.ne.s32.totalorder %s203, %s219
      %p221 = scmp.eq.s32.totalorder %s32, 0
      %p222 = por %p220, %p221
      %s223 = ssub.s32 %s35, %s44
      %s224 = ssub.s32 %s34, %s48
      %s225 = sor.u32 %s223, %s224
      %s226 = ssub.s32 %s33, %s52
      %s227 = sor.u32 %s225, %s226
      %p228 = scmp.eq.s32.totalorder %s227, 0
      %s230 = sadd.s32 %s229, 1
      %s231 = scalar_select %p228, %s229, %s230
      %p234 = pneg %p228
      %p235 = scmp.eq.s32.totalorder %s26, 1
      %p236 = por %p234, %p235
      %p237 = scmp.ne.s32.totalorder %s229, %s232
      %p238 = scmp.eq.s32.totalorder %s26, 0
      %p239 = por %p237, %p238
      %p240 = scmp.ne.s32.totalorder %s229, %s232
      %p241 = scmp.eq.s32.totalorder %s31, 1
      %p242 = por %p240, %p241
      %p243 = scmp.ne.s32.totalorder %s232, %s233
      %p244 = scmp.eq.s32.totalorder %s31, 0
      %p245 = por %p243, %p244
      %p246 = scmp.ne.s32.totalorder %s232, %s233
      %p247 = scmp.eq.s32.totalorder %s32, 1
      %p248 = por %p246, %p247
      %p250 = scmp.ne.s32.totalorder %s233, %s249
      %p251 = scmp.eq.s32.totalorder %s32, 0
      %p252 = por %p250, %p251
      %p253 = scmp.le.s32.totalorder 1, %s26
      %p254 = scmp.lt.s32.totalorder %s26, 3
      %p255 = pnand %p253, %p254
      %p256 = pneg %p255
      // Predicated region
      $region9: #{tpu_custom_call.1} parent=5 // pred_check
        _
      $region10: #{tpu_custom_call.1} parent=5 // pred_check_branch
        %258 = sbr.rel (%p255) target = $region12
      $region11: #{tpu_custom_call.1} parent=5 // pred_region
        %s259 = ssub.s32 %s26, 1
        // Predicated region
        $region13: #{tpu_custom_call.1} parent=11 // pred_check
          %p260 = pneg %p129
        $region14: #{tpu_custom_call.1} parent=11 // pred_check_branch
          %262 = sbr.rel (%p260) target = $region16
        $region15: #{tpu_custom_call.1} parent=11 // pred_region
          %s263 = smul.u32 4, %s37
          %s265 = ssub.s32 2048, 2048
          %266 = vsyncadd [#allocation6], %s265
          %s267 = sadd.s32 %s36, %s263
          %s268 = smul.addr %s267, 128
          %s269 = scalar_lea.hbm %s2, %s268
          %s270 = sshll.u32 [#allocation7], 4
          %s271 = int_to_ptr.vmem [resolvable:$true] %s270
          %276 = dma.hbm_to_vmem [thread:$0]  %s269, 2048, %s271, [#allocation6], 128, 128, 8
        $region16: #{tpu_custom_call.1} parent=11 // pred_fallthru
          _
        // Predicated region
        $region17: #{tpu_custom_call.1} parent=11 // pred_check
          %p277 = pneg %p157
        $region18: #{tpu_custom_call.1} parent=11 // pred_check_branch
          %279 = sbr.rel (%p277) target = $region20
        $region19: #{tpu_custom_call.1} parent=11 // pred_region
          %s280 = smul.u32 4, %s37
          %s282 = ssub.s32 2048, 2048
          %283 = vsyncadd [#allocation9], %s282
          %s284 = sadd.s32 %s36, %s280
          %s285 = smul.addr %s284, 128
          %s286 = scalar_lea.hbm %s3, %s285
          %s287 = sshll.u32 [#allocation8], 4
          %s288 = int_to_ptr.vmem [resolvable:$true] %s287
          %293 = dma.hbm_to_vmem [thread:$0]  %s286, 2048, %s288, [#allocation9], 128, 128, 8
        $region20: #{tpu_custom_call.1} parent=11 // pred_fallthru
          _
        // Predicated region
        $region21: #{tpu_custom_call.1} parent=11 // pred_check
          %p294 = pneg %p185
        $region22: #{tpu_custom_call.1} parent=11 // pred_check_branch
          %296 = sbr.rel (%p294) target = $region24
        $region23: #{tpu_custom_call.1} parent=11 // pred_region
          %s297 = smul.u32 4, %s37
          %s299 = ssub.s32 2048, 2048
          %300 = vsyncadd [#allocation9], %s299
          %s301 = sadd.s32 %s36, %s297
          %s302 = smul.addr %s301, 128
          %s303 = scalar_lea.hbm %s4, %s302
          %s304 = sshll.u32 [#allocation10], 4
          %s305 = int_to_ptr.vmem [resolvable:$true] %s304
          %310 = dma.hbm_to_vmem [thread:$0]  %s303, 2048, %s305, [#allocation9], 128, 128, 8
        $region24: #{tpu_custom_call.1} parent=11 // pred_fallthru
          _
      $region12: #{tpu_custom_call.1} parent=5 // pred_fallthru
        _
      %p311 = scmp.lt.s32.totalorder %s26, 2
      // Predicated region
      $region25: #{tpu_custom_call.1} parent=5 // pred_check
        %p312 = pneg %p311
      $region26: #{tpu_custom_call.1} parent=5 // pred_check_branch
        %314 = sbr.rel (%p312) target = $region28
      $region27: #{tpu_custom_call.1} parent=5 // pred_region
        // Predicated region
        $region29: #{tpu_custom_call.1} parent=27 // pred_check
          %p315 = pneg %p67
        $region30: #{tpu_custom_call.1} parent=27 // pred_check_branch
          %317 = sbr.rel (%p315) target = $region32
        $region31: #{tpu_custom_call.1} parent=27 // pred_region
          %s318 = sand.u32 %s57, 1
          %s319 = scalar_lea.sflag [#allocation3], %s318
          %s320 = sand.u32 %s57, 1
          %s321 = smul.addr %s320, 32
          %s322 = scalar_lea.vmem [#allocation2], %s321
          %s324 = ssub.s32 512, 512
          %325 = vsyncadd %s319, %s324
          %s326 = sadd.s32 %s33, %s35
          %s327 = smul.addr %s326, 128
          %s328 = scalar_lea.hbm %s0, %s327
          %s329 = sshll.u32 %s322, 4
          %s330 = int_to_ptr.vmem [resolvable:$true] %s329
          %335 = dma.hbm_to_vmem [thread:$0]  %s328, 512, %s330, %s319, 256, 128, 8
        $region32: #{tpu_custom_call.1} parent=27 // pred_fallthru
          _
        // Predicated region
        $region33: #{tpu_custom_call.1} parent=27 // pred_check
          %p336 = pneg %p95
        $region34: #{tpu_custom_call.1} parent=27 // pred_check_branch
          %338 = sbr.rel (%p336) target = $region36
        $region35: #{tpu_custom_call.1} parent=27 // pred_region
          %s339 = sand.u32 %s26, 1
          %s340 = scalar_lea.sflag [#allocation6], %s339
          %s341 = sand.u32 %s85, 1
          %s342 = smul.addr %s341, 32
          %s343 = scalar_lea.vmem [#allocation5], %s342
          %s345 = ssub.s32 512, 512
          %346 = vsyncadd %s340, %s345
          %s347 = sadd.s32 %s33, %s35
          %s348 = smul.addr %s347, 128
          %s349 = scalar_lea.hbm %s1, %s348
          %s350 = sshll.u32 %s343, 4
          %s351 = int_to_ptr.vmem [resolvable:$true] %s350
          %356 = dma.hbm_to_vmem [thread:$0]  %s349, 512, %s351, %s340, 256, 128, 8
        $region36: #{tpu_custom_call.1} parent=27 // pred_fallthru
          _
      $region28: #{tpu_custom_call.1} parent=5 // pred_fallthru
        _
      %p357 = scmp.le.s32.totalorder 1, %s26
      %p358 = scmp.lt.s32.totalorder %s26, 3
      %p359 = pnand %p357, %p358
      %p360 = pneg %p359
      // Predicated region
      $region37: #{tpu_custom_call.1} parent=5 // pred_check
        _
      $region38: #{tpu_custom_call.1} parent=5 // pred_check_branch
        %362 = sbr.rel (%p359) target = $region40
      $region39: #{tpu_custom_call.1} parent=5 // pred_region
        %s363 = ssub.s32 %s26, 1
        %s364 = sand.u32 %s60, 1
        %s365 = scalar_lea.sflag [#allocation3], %s364
        %s366 = sand.u32 %s60, 1
        %s367 = smul.addr %s366, 32
        %s368 = scalar_lea.vmem [#allocation2], %s367
        // Predicated region
        $region41: #{tpu_custom_call.1} parent=39 // pred_check
          %p369 = pneg %p73
        $region42: #{tpu_custom_call.1} parent=39 // pred_check_branch
          %371 = sbr.rel (%p369) target = $region44
        $region43: #{tpu_custom_call.1} parent=39 // pred_region
          %372 = dma.done %s365, 512
        $region44: #{tpu_custom_call.1} parent=39 // pred_fallthru
          _
        %s373 = sand.u32 %s31, 1
        %s374 = scalar_lea.sflag [#allocation6], %s373
        %s375 = sand.u32 %s88, 1
        %s376 = smul.addr %s375, 32
        %s377 = scalar_lea.vmem [#allocation5], %s376
        // Predicated region
        $region45: #{tpu_custom_call.1} parent=39 // pred_check
          %p378 = pneg %p101
        $region46: #{tpu_custom_call.1} parent=39 // pred_check_branch
          %380 = sbr.rel (%p378) target = $region48
        $region47: #{tpu_custom_call.1} parent=39 // pred_region
          %381 = dma.done %s374, 512
        $region48: #{tpu_custom_call.1} parent=39 // pred_fallthru
          _
        // Predicated region
        $region49: #{tpu_custom_call.1} parent=39 // pred_check
          %p382 = pneg %p129
        $region50: #{tpu_custom_call.1} parent=39 // pred_check_branch
          %384 = sbr.rel (%p382) target = $region52
        $region51: #{tpu_custom_call.1} parent=39 // pred_region
          %385 = dma.done [#allocation6], 2048
        $region52: #{tpu_custom_call.1} parent=39 // pred_fallthru
          _
        // Predicated region
        $region53: #{tpu_custom_call.1} parent=39 // pred_check
          %p386 = pneg %p157
        $region54: #{tpu_custom_call.1} parent=39 // pred_check_branch
          %388 = sbr.rel (%p386) target = $region56
        $region55: #{tpu_custom_call.1} parent=39 // pred_region
          %389 = dma.done [#allocation9], 2048
        $region56: #{tpu_custom_call.1} parent=39 // pred_fallthru
          _
        // Predicated region
        $region57: #{tpu_custom_call.1} parent=39 // pred_check
          %p390 = pneg %p185
        $region58: #{tpu_custom_call.1} parent=39 // pred_check_branch
          %392 = sbr.rel (%p390) target = $region60
        $region59: #{tpu_custom_call.1} parent=39 // pred_region
          %393 = dma.done [#allocation9], 2048
        $region60: #{tpu_custom_call.1} parent=39 // pred_fallthru
          _
        %s394 = sand.u32 %s60, 1
        %s395 = scalar_lea.sflag [#allocation3], %s394
        %s396 = sand.u32 %s60, 1
        %s397 = smul.addr %s396, 32
        %s398 = scalar_lea.vmem [#allocation2], %s397
        %p399 = pneg %p73
        %p400 = pneg %p70
        %s401 = sand.u32 %s31, 1
        %s402 = scalar_lea.sflag [#allocation6], %s401
        %s403 = sand.u32 %s88, 1
        %s404 = smul.addr %s403, 32
        %s405 = scalar_lea.vmem [#allocation5], %s404
        %p406 = pneg %p101
        %p407 = pneg %p98
        %p408 = pneg %p129
        %p409 = pneg %p126
        %p410 = pneg %p157
        %p411 = pneg %p154
        %p412 = pneg %p185
        %p413 = pneg %p182
        %p414 = pneg %p215
        %p415 = pneg %p212
        %s416 = sand.u32 %s202, 1
        %s417 = scalar_lea.sflag [#allocation4], %s416
        %s418 = sand.u32 %s202, 1
        %s419 = smul.addr %s418, 32
        %s420 = scalar_lea.vmem [#allocation11], %s419
        %p421 = pneg %p245
        %p422 = pneg %p242
        %s423 = sand.u32 %s232, 1
        %s424 = scalar_lea.sflag [#allocation13], %s423
        %s425 = sand.u32 %s232, 1
        %s426 = smul.addr %s425, 32
        %s427 = scalar_lea.vmem [#allocation12], %s426
        %s428 = smul.u32 4, %s37
        %s429 = smul.u32 4, %s37
        %s430 = smul.u32 4, %s37
        %s431 = smul.u32 4, %s37
        %s432 = smul.u32 4, %s37
        %v433 = vld [vmem:[%s368] sm:$0xff]
        %v434 = vld [vmem:[%s377] sm:$0xff]
        %v435 = vadd.f32 %v433, %v434
        %v436 = vld [vmem:[#allocation7] sm:$0xff]
        %v437 = vld [vmem:[#allocation7 + $0x8] sm:$0xff]
        %v438 = vld [vmem:[#allocation7 + $0x10] sm:$0xff]
        %v439 = vld [vmem:[#allocation7 + $0x18] sm:$0xff]
        %v440 = vmul.f32 %v436, %v435
        %v441 = vmul.f32 %v437, %v435
        %v442 = vmul.f32 %v438, %v435
        %v443 = vmul.f32 %v439, %v435
        %v444 = vld [vmem:[#allocation8] sm:$0xff]
        %v445 = vld [vmem:[#allocation8 + $0x8] sm:$0xff]
        %v446 = vld [vmem:[#allocation8 + $0x10] sm:$0xff]
        %v447 = vld [vmem:[#allocation8 + $0x18] sm:$0xff]
        %v448 = vmul.f32 %v444, %v434
        %v449 = vmul.f32 %v445, %v434
        %v450 = vmul.f32 %v446, %v434
        %v451 = vmul.f32 %v447, %v434
        %v452 = vsub.f32 %v440, %v448
        %v453 = vsub.f32 %v441, %v449
        %v454 = vsub.f32 %v442, %v450
        %v455 = vsub.f32 %v443, %v451
        %v456 = vadd.f32 %v452, 0.0
        %v457 = vadd.f32 %v453, 0.0
        %v458 = vadd.f32 %v454, 0.0
        %v459 = vadd.f32 %v455, 0.0
        %v460 = vld [vmem:[#allocation10] sm:$0xff]
        %v461 = vld [vmem:[#allocation10 + $0x8] sm:$0xff]
        %v462 = vld [vmem:[#allocation10 + $0x10] sm:$0xff]
        %v463 = vld [vmem:[#allocation10 + $0x18] sm:$0xff]
        %v464 = vmul.f32 %v460, %v433
        %v465 = vmul.f32 %v461, %v433
        %v466 = vmul.f32 %v462, %v433
        %v467 = vmul.f32 %v463, %v433
        %v468 = vadd.f32 %v440, %v464
        %v469 = vadd.f32 %v441, %v465
        %v470 = vadd.f32 %v442, %v466
        %v471 = vadd.f32 %v443, %v467
        %v472 = vadd.f32 %v468, 0.0
        %v473 = vadd.f32 %v469, 0.0
        %v474 = vadd.f32 %v470, 0.0
        %v475 = vadd.f32 %v471, 0.0
        %s476 = scalar_lea.vmem %s368, 8 [#allocation2]
        %v477 = vld [vmem:[%s476] sm:$0xff]
        %s478 = scalar_lea.vmem %s377, 8 [#allocation5]
        %v479 = vld [vmem:[%s478] sm:$0xff]
        %v480 = vadd.f32 %v477, %v479
        %s481 = scalar_lea.vmem [#allocation7], 32
        %v482 = vld [vmem:[%s481] sm:$0xff]
        %v483 = vld [vmem:[%s481 + $0x8] sm:$0xff]
        %v484 = vld [vmem:[%s481 + $0x10] sm:$0xff]
        %v485 = vld [vmem:[%s481 + $0x18] sm:$0xff]
        %v486 = vmul.f32 %v482, %v480
        %v487 = vmul.f32 %v483, %v480
        %v488 = vmul.f32 %v484, %v480
        %v489 = vmul.f32 %v485, %v480
        %s490 = scalar_lea.vmem [#allocation8], 32
        %v491 = vld [vmem:[%s490] sm:$0xff]
        %v492 = vld [vmem:[%s490 + $0x8] sm:$0xff]
        %v493 = vld [vmem:[%s490 + $0x10] sm:$0xff]
        %v494 = vld [vmem:[%s490 + $0x18] sm:$0xff]
        %v495 = vmul.f32 %v491, %v479
        %v496 = vmul.f32 %v492, %v479
        %v497 = vmul.f32 %v493, %v479
        %v498 = vmul.f32 %v494, %v479
        %v499 = vsub.f32 %v486, %v495
        %v500 = vsub.f32 %v487, %v496
        %v501 = vsub.f32 %v488, %v497
        %v502 = vsub.f32 %v489, %v498
        %v503 = vadd.f32 %v456, %v499
        %v504 = vadd.f32 %v457, %v500
        %v505 = vadd.f32 %v458, %v501
        %v506 = vadd.f32 %v459, %v502
        %s507 = scalar_lea.vmem [#allocation10], 32
        %v508 = vld [vmem:[%s507] sm:$0xff]
        %v509 = vld [vmem:[%s507 + $0x8] sm:$0xff]
        %v510 = vld [vmem:[%s507 + $0x10] sm:$0xff]
        %v511 = vld [vmem:[%s507 + $0x18] sm:$0xff]
        %v512 = vmul.f32 %v508, %v477
        %v513 = vmul.f32 %v509, %v477
        %v514 = vmul.f32 %v510, %v477
        %v515 = vmul.f32 %v511, %v477
        %v516 = vadd.f32 %v486, %v512
        %v517 = vadd.f32 %v487, %v513
        %v518 = vadd.f32 %v488, %v514
        %v519 = vadd.f32 %v489, %v515
        %v520 = vadd.f32 %v472, %v516
        %v521 = vadd.f32 %v473, %v517
        %v522 = vadd.f32 %v474, %v518
        %v523 = vadd.f32 %v475, %v519
        %s524 = scalar_lea.vmem %s368, 16 [#allocation2]
        %v525 = vld [vmem:[%s524] sm:$0xff]
        %s526 = scalar_lea.vmem %s377, 16 [#allocation5]
        %v527 = vld [vmem:[%s526] sm:$0xff]
        %v528 = vadd.f32 %v525, %v527
        %s529 = scalar_lea.vmem [#allocation7], 64
        %v530 = vld [vmem:[%s529] sm:$0xff]
        %v531 = vld [vmem:[%s529 + $0x8] sm:$0xff]
        %v532 = vld [vmem:[%s529 + $0x10] sm:$0xff]
        %v533 = vld [vmem:[%s529 + $0x18] sm:$0xff]
        %v534 = vmul.f32 %v530, %v528
        %v535 = vmul.f32 %v531, %v528
        %v536 = vmul.f32 %v532, %v528
        %v537 = vmul.f32 %v533, %v528
        %s538 = scalar_lea.vmem [#allocation8], 64
        %v539 = vld [vmem:[%s538] sm:$0xff]
        %v540 = vld [vmem:[%s538 + $0x8] sm:$0xff]
        %v541 = vld [vmem:[%s538 + $0x10] sm:$0xff]
        %v542 = vld [vmem:[%s538 + $0x18] sm:$0xff]
        %v543 = vmul.f32 %v539, %v527
        %v544 = vmul.f32 %v540, %v527
        %v545 = vmul.f32 %v541, %v527
        %v546 = vmul.f32 %v542, %v527
        %v547 = vsub.f32 %v534, %v543
        %v548 = vsub.f32 %v535, %v544
        %v549 = vsub.f32 %v536, %v545
        %v550 = vsub.f32 %v537, %v546
        %v551 = vadd.f32 %v503, %v547
        %v552 = vadd.f32 %v504, %v548
        %v553 = vadd.f32 %v505, %v549
        %v554 = vadd.f32 %v506, %v550
        %s555 = scalar_lea.vmem [#allocation10], 64
        %v556 = vld [vmem:[%s555] sm:$0xff]
        %v557 = vld [vmem:[%s555 + $0x8] sm:$0xff]
        %v558 = vld [vmem:[%s555 + $0x10] sm:$0xff]
        %v559 = vld [vmem:[%s555 + $0x18] sm:$0xff]
        %v560 = vmul.f32 %v556, %v525
        %v561 = vmul.f32 %v557, %v525
        %v562 = vmul.f32 %v558, %v525
        %v563 = vmul.f32 %v559, %v525
        %v564 = vadd.f32 %v534, %v560
        %v565 = vadd.f32 %v535, %v561
        %v566 = vadd.f32 %v536, %v562
        %v567 = vadd.f32 %v537, %v563
        %v568 = vadd.f32 %v520, %v564
        %v569 = vadd.f32 %v521, %v565
        %v570 = vadd.f32 %v522, %v566
        %v571 = vadd.f32 %v523, %v567
        %s572 = scalar_lea.vmem %s368, 24 [#allocation2]
        %v573 = vld [vmem:[%s572] sm:$0xff]
        %s574 = scalar_lea.vmem %s377, 24 [#allocation5]
        %v575 = vld [vmem:[%s574] sm:$0xff]
        %v576 = vadd.f32 %v573, %v575
        %s577 = scalar_lea.vmem [#allocation7], 96
        %v578 = vld [vmem:[%s577] sm:$0xff]
        %v579 = vld [vmem:[%s577 + $0x8] sm:$0xff]
        %v580 = vld [vmem:[%s577 + $0x10] sm:$0xff]
        %v581 = vld [vmem:[%s577 + $0x18] sm:$0xff]
        %v582 = vmul.f32 %v578, %v576
        %v583 = vmul.f32 %v579, %v576
        %v584 = vmul.f32 %v580, %v576
        %v585 = vmul.f32 %v581, %v576
        %s586 = scalar_lea.vmem [#allocation8], 96
        %v587 = vld [vmem:[%s586] sm:$0xff]
        %v588 = vld [vmem:[%s586 + $0x8] sm:$0xff]
        %v589 = vld [vmem:[%s586 + $0x10] sm:$0xff]
        %v590 = vld [vmem:[%s586 + $0x18] sm:$0xff]
        %v591 = vmul.f32 %v587, %v575
        %v592 = vmul.f32 %v588, %v575
        %v593 = vmul.f32 %v589, %v575
        %v594 = vmul.f32 %v590, %v575
        %v595 = vsub.f32 %v582, %v591
        %v596 = vsub.f32 %v583, %v592
        %v597 = vsub.f32 %v584, %v593
        %v598 = vsub.f32 %v585, %v594
        %v599 = vadd.f32 %v551, %v595
        %v600 = vadd.f32 %v552, %v596
        %v601 = vadd.f32 %v553, %v597
        %v602 = vadd.f32 %v554, %v598
        %s603 = scalar_lea.vmem [#allocation10], 96
        %v604 = vld [vmem:[%s603] sm:$0xff]
        %v605 = vld [vmem:[%s603 + $0x8] sm:$0xff]
        %v606 = vld [vmem:[%s603 + $0x10] sm:$0xff]
        %v607 = vld [vmem:[%s603 + $0x18] sm:$0xff]
        %v608 = vmul.f32 %v604, %v573
        %v609 = vmul.f32 %v605, %v573
        %v610 = vmul.f32 %v606, %v573
        %v611 = vmul.f32 %v607, %v573
        %v612 = vadd.f32 %v582, %v608
        %v613 = vadd.f32 %v583, %v609
        %v614 = vadd.f32 %v584, %v610
        %v615 = vadd.f32 %v585, %v611
        %v616 = vadd.f32 %v568, %v612
        %v617 = vadd.f32 %v569, %v613
        %v618 = vadd.f32 %v570, %v614
        %v619 = vadd.f32 %v571, %v615
        %620 = vst [vmem:[%s420] sm:$0xff] %v599
        %621 = vst [vmem:[%s420 + $0x8] sm:$0xff] %v600
        %622 = vst [vmem:[%s420 + $0x10] sm:$0xff] %v601
        %623 = vst [vmem:[%s420 + $0x18] sm:$0xff] %v602
        %624 = vst [vmem:[%s427] sm:$0xff] %v616
        %625 = vst [vmem:[%s427 + $0x8] sm:$0xff] %v617
        %626 = vst [vmem:[%s427 + $0x10] sm:$0xff] %v618
        %627 = vst [vmem:[%s427 + $0x18] sm:$0xff] %v619
        %s628 = sand.u32 %s202, 1
        %s629 = scalar_lea.sflag [#allocation4], %s628
        %s630 = sand.u32 %s202, 1
        %s631 = smul.addr %s630, 32
        %s632 = scalar_lea.vmem [#allocation11], %s631
        %s633 = sand.u32 %s232, 1
        %s634 = scalar_lea.sflag [#allocation13], %s633
        %s635 = sand.u32 %s232, 1
        %s636 = smul.addr %s635, 32
        %s637 = scalar_lea.vmem [#allocation12], %s636
        // Predicated region
        $region61: #{tpu_custom_call.1} parent=39 // pred_check
          %p638 = pneg %p212
        $region62: #{tpu_custom_call.1} parent=39 // pred_check_branch
          %640 = sbr.rel (%p638) target = $region64
        $region63: #{tpu_custom_call.1} parent=39 // pred_region
          %s641 = smul.u32 4, %s37
          %s643 = ssub.s32 512, 512
          %644 = vsyncadd %s629, %s643
          %s645 = sadd.s32 %s36, %s641
          %s646 = smul.addr %s38, 4
          %s647 = sadd.s32 %s645, %s646
          %s648 = smul.addr %s647, 128
          %s649 = scalar_lea.hbm %s5, %s648
          %s650 = sshll.u32 %s632, 4
          %s651 = int_to_ptr.vmem [resolvable:$true] %s650
          %656 = dma.vmem_to_hbm [thread:$0]  %s651, 512, %s649, %s629, 128, 128, 8
        $region64: #{tpu_custom_call.1} parent=39 // pred_fallthru
          _
        // Predicated region
        $region65: #{tpu_custom_call.1} parent=39 // pred_check
          %p657 = pneg %p242
        $region66: #{tpu_custom_call.1} parent=39 // pred_check_branch
          %659 = sbr.rel (%p657) target = $region68
        $region67: #{tpu_custom_call.1} parent=39 // pred_region
          %s660 = smul.u32 4, %s37
          %s662 = ssub.s32 512, 512
          %663 = vsyncadd %s634, %s662
          %s664 = sadd.s32 %s36, %s660
          %s665 = smul.addr %s38, 4
          %s666 = sadd.s32 %s664, %s665
          %s667 = smul.addr %s666, 128
          %s668 = scalar_lea.hbm %s6, %s667
          %s669 = sshll.u32 %s637, 4
          %s670 = int_to_ptr.vmem [resolvable:$true] %s669
          %675 = dma.vmem_to_hbm [thread:$0]  %s670, 512, %s668, %s634, 128, 128, 8
        $region68: #{tpu_custom_call.1} parent=39 // pred_fallthru
          _
      $region40: #{tpu_custom_call.1} parent=5 // pred_fallthru
        _
      %p676 = scmp.le.s32.totalorder 2, %s26
      // Predicated region
      $region69: #{tpu_custom_call.1} parent=5 // pred_check
        %p677 = pneg %p676
      $region70: #{tpu_custom_call.1} parent=5 // pred_check_branch
        %679 = sbr.rel (%p677) target = $region72
      $region71: #{tpu_custom_call.1} parent=5 // pred_region
        %s680 = ssub.s32 %s26, 2
        // Predicated region
        $region73: #{tpu_custom_call.1} parent=71 // pred_check
          %p681 = pneg %p218
        $region74: #{tpu_custom_call.1} parent=71 // pred_check_branch
          %683 = sbr.rel (%p681) target = $region76
        $region75: #{tpu_custom_call.1} parent=71 // pred_region
          %s684 = sand.u32 %s203, 1
          %s685 = scalar_lea.sflag [#allocation4], %s684
          %s686 = sand.u32 %s203, 1
          %s687 = smul.addr %s686, 32
          %s688 = scalar_lea.vmem [#allocation11], %s687
          %689 = dma.done %s685, 512
        $region76: #{tpu_custom_call.1} parent=71 // pred_fallthru
          _
        // Predicated region
        $region77: #{tpu_custom_call.1} parent=71 // pred_check
          %p690 = pneg %p248
        $region78: #{tpu_custom_call.1} parent=71 // pred_check_branch
          %692 = sbr.rel (%p690) target = $region80
        $region79: #{tpu_custom_call.1} parent=71 // pred_region
          %s693 = sand.u32 %s233, 1
          %s694 = scalar_lea.sflag [#allocation13], %s693
          %s695 = sand.u32 %s233, 1
          %s696 = smul.addr %s695, 32
          %s697 = scalar_lea.vmem [#allocation12], %s696
          %698 = dma.done %s694, 512
        $region80: #{tpu_custom_call.1} parent=71 // pred_fallthru
          _
      $region72: #{tpu_custom_call.1} parent=5 // pred_fallthru
        _
    $region6: #{tpu_custom_call.1} parent=1 // loop_footer
      %s30 = sadd.s32 1, %s26
    $region7: #{tpu_custom_call.1} parent=1 // loop_footer_branch
      %25 = sbr.rel target = $region3
    $region8: #{tpu_custom_call.1} parent=1 // loop_exit
      _
    %699 = vsyncpa [#allocation3], 1
    %s700 = scalar_lea.sflag [#allocation3], 1
    %701 = vsyncpa %s700, 1
    %702 = vsyncpa [#allocation6], 1
    %s703 = scalar_lea.sflag [#allocation6], 1
    %704 = vsyncpa %s703, 1
    %705 = vsyncpa [#allocation9], 1
    %706 = vsyncpa [#allocation4], 1
    %s707 = scalar_lea.sflag [#allocation4], 1
    %708 = vsyncpa %s707, 1
    %709 = vsyncpa [#allocation13], 1
    %s710 = scalar_lea.sflag [#allocation13], 1
    %711 = vsyncpa %s710, 1

</llo_original>
